<compile_context>
chip_gen: v7x
topology: tpu7x:2x2x1
jax: 0.10.0
libtpu: 0.0.40
codegen_flags: <defaults>
</compile_context>

<pallas_src>
import functools
import math

import jax
import jax.numpy as jnp
from jax.experimental import pallas as pl
from jax.experimental.pallas import tpu as pltpu


def _t2v_kernel(x_ref, W_ref, pp_ref, out_ref, *, output_size):
    # x_ref : (TM, in)            input rows
    # W_ref : (in, out)           frequency matrix (resident, constant index)
    # pp_ref: (TM, out + 2)       packed params: [:, :out]=P, [:, out]=w, [:, out+1]=p
    # out_ref: (TM, out + in)     fused output: [:, :out]=sin, [:, out:]=w*x+p
    x = x_ref[...]

    # MXU matmul with f32 accumulation, then sin (f32) — matches the reference.
    xw = jnp.dot(x, W_ref[...], preferred_element_type=jnp.float32)
    P = pp_ref[:, :output_size].astype(jnp.float32)
    out_ref[:, :output_size] = jnp.sin(xw + P).astype(out_ref.dtype)

    # VPU elementwise path: (TM,1) params broadcast against (TM,in).
    w = pp_ref[:, output_size:output_size + 1]
    p = pp_ref[:, output_size + 1:output_size + 2]
    out_ref[:, output_size:] = (w * x + p).astype(out_ref.dtype)


def _choose_tile_m(M, seq_len, target, *, vmem_budget_bytes=36 * 1024 * 1024):
    """Row-tile size.

    Constraints:
      * multiple of lcm(seq_len, 8): keeps P/w/p phase alignment per tile and
        satisfies the sublane constraint,
      * capped by a VMEM budget (x + param slab + fused output, each lane-
        padded to 128 and double-buffered => ~3 KiB/row for f32),
      * capped at M/2 (when possible) so grid_m >= 2 and the parallel axis
        shards across both v7x TensorCores.
    """
    base = seq_len * 8 // math.gcd(seq_len, 8)  # lcm(seq_len, 8)
    if M <= base:
        return base

    per_row_bytes = 3 * 128 * 4 * 2  # 3 blocks x 128 lanes x 4 B x 2 buffers
    vmem_cap = max((vmem_budget_bytes // per_row_bytes), base)

    cap = min(target, vmem_cap, M)
    half = (M // 2) // base * base  # keep grid_m >= 2 when it fits
    if half >= base:
        cap = min(cap, half)

    tm = (cap // base) * base
    return max(tm, base)


def time2vec(x, W, P, w, p, *, target_tile_m=8192):
    """x: (batch, seq, in). Returns (batch, seq, out + in)."""
    batch, seq_len, input_size = x.shape
    output_size = W.shape[1]
    M = batch * seq_len

    tm = _choose_tile_m(M, seq_len, target_tile_m)
    reps = tm // seq_len
    grid_m = pl.cdiv(M, tm)

    # Flatten batch*seq into one M axis; pack P/w/p into one slab and pre-tile
    # it once (in XLA) to exactly one row tile, fetched once by the kernel.
    x2 = x.reshape(M, input_size)
    pp = jnp.concatenate([P, w, p], axis=-1)        # (seq_len, out + 2)
    pp_t = jnp.tile(pp, (reps, 1))                  # (tm, out + 2)

    out_flat = pl.pallas_call(
        functools.partial(_t2v_kernel, output_size=output_size),
        out_shape=jax.ShapeDtypeStruct((M, output_size + input_size), x.dtype),
        grid_spec=pltpu.PrefetchScalarGridSpec(
            num_scalar_prefetch=0,
            grid=(grid_m,),
            in_specs=[
                pl.BlockSpec((tm, input_size), lambda i: (i, 0)),
                pl.BlockSpec((input_size, output_size), lambda i: (0, 0)),
                pl.BlockSpec((tm, output_size + 2), lambda i: (0, 0)),
            ],
            out_specs=pl.BlockSpec(
                (tm, output_size + input_size), lambda i: (i, 0)),
        ),
        compiler_params=pltpu.CompilerParams(
            dimension_semantics=("parallel",),
            vmem_limit_bytes=48 * 1024 * 1024,
        ),
    )(x2, W, pp_t)

    return out_flat.reshape(batch, seq_len, output_size + input_size)


def time2vec_ref(x, W, P, w, p):
    sin_trans = jnp.sin(jnp.matmul(x, W) + P)
    original = w * x + p
    return jnp.concatenate([sin_trans, original], axis=-1)


if __name__ == "__main__":
    # Module hyper-params (matching Time2Vec(__init__) shapes).
    batch = 2
    seq_len = 8
    input_size = 16
    output_size = 32

    key = jax.random.PRNGKey(0)
    kx, kW, kP, kw, kp, kx2 = jax.random.split(key, 6)

    # Deterministic parameter init, mimicking torch.nn.init.uniform_ (U[0,1)).
    W = jax.random.uniform(kW, (input_size, output_size), dtype=jnp.float32)
    P = jax.random.uniform(kP, (seq_len, output_size), dtype=jnp.float32)
    w = jax.random.uniform(kw, (seq_len, 1), dtype=jnp.float32)
    p = jax.random.uniform(kp, (seq_len, 1), dtype=jnp.float32)

    x = jax.random.normal(kx, (batch, seq_len, input_size), dtype=jnp.float32)

    ref = time2vec_ref(x, W, P, w, p)

    # Default config (TM capped to M/2 at these tiny shapes -> 2 grid steps).
    out = jax.block_until_ready(time2vec(x, W, P, w, p))
    assert out.shape == (batch, seq_len, output_size + input_size)
    assert jnp.allclose(out, ref, atol=1e-5, rtol=1e-5)

    # Force a tile of exactly seq_len rows to exercise tiling / P-w-p phase
    # alignment across multiple grid steps.
    out_tiled = jax.block_until_ready(time2vec(x, W, P, w, p, target_tile_m=8))
    assert jnp.allclose(out_tiled, ref, atol=1e-5, rtol=1e-5)

    # Ragged-M case (M % tm != 0) exercises the masked final tile.
    x_big = jax.random.normal(kx2, (5, seq_len, input_size), dtype=jnp.float32)
    ref_big = time2vec_ref(x_big, W, P, w, p)
    out_big = jax.block_until_ready(time2vec(x_big, W, P, w, p))
    assert jnp.allclose(out_big, ref_big, atol=1e-5, rtol=1e-5)

    print("KERNEL_OK")
</pallas_src>

<mosaic_0001>
module attributes {stable_mosaic.version = 11 : i64} {
  func.func @_t2v_kernel(%arg0: i32, %arg1: memref<8x16xf32, #tpu.memory_space<vmem>>, %arg2: memref<16x32xf32, #tpu.memory_space<vmem>>, %arg3: memref<8x34xf32, #tpu.memory_space<vmem>>, %arg4: memref<8x48xf32, #tpu.memory_space<vmem>>) attributes {dimension_semantics = [#tpu.dimension_semantics<parallel>], iteration_bounds = array<i64: 2>, scalar_prefetch = 0 : i64, scratch_operands = 0 : i64, tpu.core_type = #tpu.core_type<tc>, window_params = [{transform_indices = @transform_0, window_bounds = array<i64: 8, 16>}, {pipeline_mode = #tpu.pipeline_mode<synchronous>, transform_indices = @transform_1, window_bounds = array<i64: 16, 32>}, {pipeline_mode = #tpu.pipeline_mode<synchronous>, transform_indices = @transform_2, window_bounds = array<i64: 8, 34>}, {transform_indices = @transform_3, window_bounds = array<i64: 8, 48>}]} {
    %c0 = arith.constant 0 : index
    %c0_0 = arith.constant 0 : index
    %0 = vector.load %arg1[%c0, %c0_0] : memref<8x16xf32, #tpu.memory_space<vmem>>, vector<8x16xf32>
    %c0_1 = arith.constant 0 : index
    %c0_2 = arith.constant 0 : index
    %1 = vector.load %arg2[%c0_1, %c0_2] : memref<16x32xf32, #tpu.memory_space<vmem>>, vector<16x32xf32>
    %cst = arith.constant dense<0.000000e+00> : vector<8x32xf32>
    %2 = tpu.matmul %0, %1, %cst {dimension_numbers = #tpu.dot_dimension_numbers<[1], [0], [0], [1], [0, 0, 1, 1], [], []>} : vector<8x16xf32>, vector<16x32xf32>, vector<8x32xf32> -> vector<8x32xf32>
    %c0_3 = arith.constant 0 : index
    %c0_4 = arith.constant 0 : index
    %3 = vector.load %arg3[%c0_3, %c0_4] : memref<8x34xf32, #tpu.memory_space<vmem>>, vector<8x32xf32>
    %4 = arith.addf %2, %3 : vector<8x32xf32>
    %5 = math.sin %4 : vector<8x32xf32>
    %c0_5 = arith.constant 0 : index
    %c0_6 = arith.constant 0 : index
    %6 = vector.load %arg4[%c0_5, %c0_6] : memref<8x48xf32, #tpu.memory_space<vmem>>, vector<8x32xf32>
    tpu.vector_store %arg4[%c0_5, %c0_6], %5 {strides = array<i32>} : memref<8x48xf32, #tpu.memory_space<vmem>>, vector<8x32xf32>,
    %c0_7 = arith.constant 0 : index
    %c32 = arith.constant 32 : index
    %7 = vector.load %arg3[%c0_7, %c32] : memref<8x34xf32, #tpu.memory_space<vmem>>, vector<8x1xf32>
    %c0_8 = arith.constant 0 : index
    %c33 = arith.constant 33 : index
    %8 = vector.load %arg3[%c0_8, %c33] : memref<8x34xf32, #tpu.memory_space<vmem>>, vector<8x1xf32>
    %9 = vector.broadcast %7 : vector<8x1xf32> to vector<8x16xf32>
    %10 = arith.mulf %9, %0 : vector<8x16xf32>
    %11 = vector.broadcast %8 : vector<8x1xf32> to vector<8x16xf32>
    %12 = arith.addf %10, %11 : vector<8x16xf32>
    %c0_9 = arith.constant 0 : index
    %c32_10 = arith.constant 32 : index
    %13 = vector.load %arg4[%c0_9, %c32_10] : memref<8x48xf32, #tpu.memory_space<vmem>>, vector<8x16xf32>
    tpu.vector_store %arg4[%c0_9, %c32_10], %12 {strides = array<i32>} : memref<8x48xf32, #tpu.memory_space<vmem>>, vector<8x16xf32>,
    return
  }
  func.func @transform_0(%arg0: i32) -> (i32, i32) {
    %c0_i32 = arith.constant 0 : i32
    %c0_i32_0 = arith.constant 0 : i32
    return %arg0, %c0_i32 : i32, i32
  }
  func.func @transform_1(%arg0: i32) -> (i32, i32) {
    %c0_i32 = arith.constant 0 : i32
    %c0_i32_0 = arith.constant 0 : i32
    %c0_i32_1 = arith.constant 0 : i32
    return %c0_i32, %c0_i32_0 : i32, i32
  }
  func.func @transform_2(%arg0: i32) -> (i32, i32) {
    %c0_i32 = arith.constant 0 : i32
    %c0_i32_0 = arith.constant 0 : i32
    %c0_i32_1 = arith.constant 0 : i32
    return %c0_i32, %c0_i32_0 : i32, i32
  }
  func.func @transform_3(%arg0: i32) -> (i32, i32) {
    %c0_i32 = arith.constant 0 : i32
    %c0_i32_0 = arith.constant 0 : i32
    return %arg0, %c0_i32 : i32, i32
  }
}

</mosaic_0001>

<llo_original>
// kernel: tpu_custom_call.1
$region0: #{tpu_custom_call.1}
  #allocation0 [shape = 'u32[]', space=smem, size = 0x4, offset = 0x4, fixed_abs, tag = 'smem constant byte address 0x4 - core index']
  #allocation1 [shape = 'u32[144,128]{1,0:T(1,128)}', space=vmem, size = 0x12000, scoped, tag = 'internal scratch']
  %s0 = inlined_call_operand.hbm [shape: f32[16,16], index: 0, kind: input, shape index: {}]
  %s1 = inlined_call_operand.hbm [shape: f32[16,32], index: 1, kind: input, shape index: {}]
  %s2 = inlined_call_operand.hbm [shape: f32[8,34], index: 2, kind: input, shape index: {}]
  %s3 = inlined_call_operand.hbm [shape: f32[16,48], index: 3, kind: output, shape index: {}]
  %s4 = sld [smem:[#allocation0]]
  $region57: #{tpu_custom_call.1} parent=0
    _
  %s6 = ssub.s32 1, %s4
  %s7 = scalar_select 0, %s6, %s4
  $region1: #{tpu_custom_call.1} parent=0
    #allocation2 [shape = 'u8[8192]{0}', space=vmem, size = 0x2000, scoped, tag = 'input window, operand 0']
    #allocation3 [shape = 's32[2]{0}', space=sflag, size = 0x8, scoped, tag = 'scoped memory for tpu_custom_call.1']
    #allocation4 [shape = 's32[2]{0}', space=sflag, size = 0x8, scoped, tag = 'scoped memory for tpu_custom_call.1']
    #allocation5 [shape = 'u8[8192]{0}', space=vmem, size = 0x2000, scoped, tag = 'input window, operand 1, single buffered']
    #allocation6 [shape = 's32[1]{0}', space=sflag, size = 0x4, scoped, tag = 'scoped memory for tpu_custom_call.1']
    #allocation7 [shape = 'u8[4096]{0}', space=vmem, size = 0x1000, scoped, tag = 'input window, operand 2, single buffered']
    #allocation8 [shape = 'u8[8192]{0}', space=vmem, size = 0x2000, scoped, tag = 'output window, operand 0']
    %8 = vsyncpa [#allocation3], 0
    %s9 = scalar_lea.sflag [#allocation3], 1
    %10 = vsyncpa %s9, 0
    %11 = vsyncpa [#allocation6], 0
    %12 = vsyncpa [#allocation4], 0
    %s13 = scalar_lea.sflag [#allocation4], 1
    %14 = vsyncpa %s13, 0
    loop: start=0, step=1, limit=4
    $region2: #{tpu_custom_call.1} parent=1 // loop_pre_header
      _
    $region3: #{tpu_custom_call.1} parent=1 // loop_header
      %s16 = sphi 0, %s20
      %p17 = scmp.ge.s32.totalorder %s16, 4
      %s26 = sphi 0, %s28
      %s29 = sphi 0, %s26
      %s30 = sphi 0, %s29
      %s46 = sphi 0, %s30
      %s50 = sphi 0, %s50
      %s52 = sphi 0, %s50
      %s53 = sphi 0, %s52
      %s67 = sphi 0, %s53
      %s71 = sphi 0, %s71
      %s73 = sphi 0, %s71
      %s74 = sphi 0, %s73
      %s88 = sphi 0, %s74
      %s94 = sphi 0, %s96
      %s97 = sphi 0, %s94
      %s98 = sphi 0, %s97
      %s114 = sphi 0, %s98
    $region4: #{tpu_custom_call.1} parent=1 // loop_header_branch
      %19 = sbr.rel (%p17) target = $region8
    $region5: #{tpu_custom_call.1} parent=1 // loop_body
      %s21 = ssub.s32 %s16, 1
      %s22 = ssub.s32 %s16, 2
      %s23 = sadd.s32 %s16, 1
      %s24 = ssub.s32 %s16, %s23
      %p25 = scmp.eq.s32.totalorder %s24, 0
      %s27 = sadd.s32 %s26, 1
      %s28 = scalar_select %p25, %s26, %s27
      %p31 = pneg %p25
      %p32 = scmp.eq.s32.totalorder %s16, 1
      %p33 = por %p31, %p32
      %p34 = scmp.ne.s32.totalorder %s26, %s29
      %p35 = scmp.eq.s32.totalorder %s16, 0
      %p36 = por %p34, %p35
      %p37 = scmp.ne.s32.totalorder %s26, %s29
      %p38 = scmp.eq.s32.totalorder %s21, 1
      %p39 = por %p37, %p38
      %p40 = scmp.ne.s32.totalorder %s29, %s30
      %p41 = scmp.eq.s32.totalorder %s21, 0
      %p42 = por %p40, %p41
      %p43 = scmp.ne.s32.totalorder %s29, %s30
      %p44 = scmp.eq.s32.totalorder %s22, 1
      %p45 = por %p43, %p44
      %p47 = scmp.ne.s32.totalorder %s30, %s46
      %p48 = scmp.eq.s32.totalorder %s22, 0
      %p49 = por %p47, %p48
      %s51 = sadd.s32 %s50, 1
      %p54 = scmp.eq.s32.totalorder %s16, 1
      %p55 = scmp.ne.s32.totalorder %s50, %s52
      %p56 = scmp.eq.s32.totalorder %s16, 0
      %p57 = por %p55, %p56
      %p58 = scmp.ne.s32.totalorder %s50, %s52
      %p59 = scmp.eq.s32.totalorder %s21, 1
      %p60 = por %p58, %p59
      %p61 = scmp.ne.s32.totalorder %s52, %s53
      %p62 = scmp.eq.s32.totalorder %s21, 0
      %p63 = por %p61, %p62
      %p64 = scmp.ne.s32.totalorder %s52, %s53
      %p65 = scmp.eq.s32.totalorder %s22, 1
      %p66 = por %p64, %p65
      %p68 = scmp.ne.s32.totalorder %s53, %s67
      %p69 = scmp.eq.s32.totalorder %s22, 0
      %p70 = por %p68, %p69
      %s72 = sadd.s32 %s71, 1
      %p75 = scmp.eq.s32.totalorder %s16, 1
      %p76 = scmp.ne.s32.totalorder %s71, %s73
      %p77 = scmp.eq.s32.totalorder %s16, 0
      %p78 = por %p76, %p77
      %p79 = scmp.ne.s32.totalorder %s71, %s73
      %p80 = scmp.eq.s32.totalorder %s21, 1
      %p81 = por %p79, %p80
      %p82 = scmp.ne.s32.totalorder %s73, %s74
      %p83 = scmp.eq.s32.totalorder %s21, 0
      %p84 = por %p82, %p83
      %p85 = scmp.ne.s32.totalorder %s73, %s74
      %p86 = scmp.eq.s32.totalorder %s22, 1
      %p87 = por %p85, %p86
      %p89 = scmp.ne.s32.totalorder %s74, %s88
      %p90 = scmp.eq.s32.totalorder %s22, 0
      %p91 = por %p89, %p90
      %s92 = ssub.s32 %s16, %s23
      %p93 = scmp.eq.s32.totalorder %s92, 0
      %s95 = sadd.s32 %s94, 1
      %s96 = scalar_select %p93, %s94, %s95
      %p99 = pneg %p93
      %p100 = scmp.eq.s32.totalorder %s16, 1
      %p101 = por %p99, %p100
      %p102 = scmp.ne.s32.totalorder %s94, %s97
      %p103 = scmp.eq.s32.totalorder %s16, 0
      %p104 = por %p102, %p103
      %p105 = scmp.ne.s32.totalorder %s94, %s97
      %p106 = scmp.eq.s32.totalorder %s21, 1
      %p107 = por %p105, %p106
      %p108 = scmp.ne.s32.totalorder %s97, %s98
      %p109 = scmp.eq.s32.totalorder %s21, 0
      %p110 = por %p108, %p109
      %p111 = scmp.ne.s32.totalorder %s97, %s98
      %p112 = scmp.eq.s32.totalorder %s22, 1
      %p113 = por %p111, %p112
      %p115 = scmp.ne.s32.totalorder %s98, %s114
      %p116 = scmp.eq.s32.totalorder %s22, 0
      %p117 = por %p115, %p116
      %p118 = scmp.le.s32.totalorder 1, %s16
      %p119 = scmp.lt.s32.totalorder %s16, 3
      %p120 = pnand %p118, %p119
      %p121 = pneg %p120
      // Predicated region
      $region9: #{tpu_custom_call.1} parent=5 // pred_check
        _
      $region10: #{tpu_custom_call.1} parent=5 // pred_check_branch
        %123 = sbr.rel (%p120) target = $region12
      $region11: #{tpu_custom_call.1} parent=5 // pred_region
        %s124 = ssub.s32 %s16, 1
        // Predicated region
        $region13: #{tpu_custom_call.1} parent=11 // pred_check
          %p125 = pneg %p63
        $region14: #{tpu_custom_call.1} parent=11 // pred_check_branch
          %127 = sbr.rel (%p125) target = $region16
        $region15: #{tpu_custom_call.1} parent=11 // pred_region
          %s129 = ssub.s32 256, 256
          %130 = vsyncadd [#allocation6], %s129
          %s131 = sshll.u32 [#allocation5], 4
          %s132 = int_to_ptr.vmem [resolvable:$true] %s131
          %137 = dma.hbm_to_vmem [thread:$0]  %s1, 256, %s132, [#allocation6], 128, 128, 8
        $region16: #{tpu_custom_call.1} parent=11 // pred_fallthru
          _
        // Predicated region
        $region17: #{tpu_custom_call.1} parent=11 // pred_check
          %p138 = pneg %p84
        $region18: #{tpu_custom_call.1} parent=11 // pred_check_branch
          %140 = sbr.rel (%p138) target = $region20
        $region19: #{tpu_custom_call.1} parent=11 // pred_region
          %s142 = ssub.s32 128, 128
          %143 = vsyncadd [#allocation6], %s142
          %s145 = sshll.u32 [#allocation7], 4
          %s146 = int_to_ptr.vmem [resolvable:$true] %s145
          %148 = dma.hbm_to_vmem [thread:$0]  %s2, 128, %s146, [#allocation6]
        $region20: #{tpu_custom_call.1} parent=11 // pred_fallthru
          _
      $region12: #{tpu_custom_call.1} parent=5 // pred_fallthru
        _
      %p149 = scmp.lt.s32.totalorder %s16, 2
      // Predicated region
      $region21: #{tpu_custom_call.1} parent=5 // pred_check
        %p150 = pneg %p149
      $region22: #{tpu_custom_call.1} parent=5 // pred_check_branch
        %152 = sbr.rel (%p150) target = $region24
      $region23: #{tpu_custom_call.1} parent=5 // pred_region
        // Predicated region
        $region25: #{tpu_custom_call.1} parent=23 // pred_check
          %p153 = pneg %p36
        $region26: #{tpu_custom_call.1} parent=23 // pred_check_branch
          %155 = sbr.rel (%p153) target = $region28
        $region27: #{tpu_custom_call.1} parent=23 // pred_region
          %s156 = sand.u32 %s26, 1
          %s157 = scalar_lea.sflag [#allocation3], %s156
          %s158 = sand.u32 %s26, 1
          %s159 = smul.addr %s158, 8
          %s160 = scalar_lea.vmem [#allocation2], %s159
          %s162 = ssub.s32 128, 128
          %163 = vsyncadd %s157, %s162
          %s164 = smul.addr %s16, 128
          %s165 = scalar_lea.hbm %s0, %s164
          %s167 = sshll.u32 %s160, 4
          %s168 = int_to_ptr.vmem [resolvable:$true] %s167
          %170 = dma.hbm_to_vmem [thread:$0]  %s165, 128, %s168, %s157
        $region28: #{tpu_custom_call.1} parent=23 // pred_fallthru
          _
      $region24: #{tpu_custom_call.1} parent=5 // pred_fallthru
        _
      %p171 = scmp.le.s32.totalorder 1, %s16
      %p172 = scmp.lt.s32.totalorder %s16, 3
      %p173 = pnand %p171, %p172
      %p174 = pneg %p173
      // Predicated region
      $region29: #{tpu_custom_call.1} parent=5 // pred_check
        _
      $region30: #{tpu_custom_call.1} parent=5 // pred_check_branch
        %176 = sbr.rel (%p173) target = $region32
      $region31: #{tpu_custom_call.1} parent=5 // pred_region
        %s177 = ssub.s32 %s16, 1
        %s178 = sand.u32 %s29, 1
        %s179 = scalar_lea.sflag [#allocation3], %s178
        %s180 = sand.u32 %s29, 1
        %s181 = smul.addr %s180, 8
        %s182 = scalar_lea.vmem [#allocation2], %s181
        // Predicated region
        $region33: #{tpu_custom_call.1} parent=31 // pred_check
          %p183 = pneg %p42
        $region34: #{tpu_custom_call.1} parent=31 // pred_check_branch
          %185 = sbr.rel (%p183) target = $region36
        $region35: #{tpu_custom_call.1} parent=31 // pred_region
          %186 = dma.done %s179, 128
        $region36: #{tpu_custom_call.1} parent=31 // pred_fallthru
          _
        // Predicated region
        $region37: #{tpu_custom_call.1} parent=31 // pred_check
          %p187 = pneg %p63
        $region38: #{tpu_custom_call.1} parent=31 // pred_check_branch
          %189 = sbr.rel (%p187) target = $region40
        $region39: #{tpu_custom_call.1} parent=31 // pred_region
          %190 = dma.done [#allocation6], 256
        $region40: #{tpu_custom_call.1} parent=31 // pred_fallthru
          _
        // Predicated region
        $region41: #{tpu_custom_call.1} parent=31 // pred_check
          %p191 = pneg %p84
        $region42: #{tpu_custom_call.1} parent=31 // pred_check_branch
          %193 = sbr.rel (%p191) target = $region44
        $region43: #{tpu_custom_call.1} parent=31 // pred_region
          %194 = dma.done [#allocation6], 128
        $region44: #{tpu_custom_call.1} parent=31 // pred_fallthru
          _
        %s195 = sand.u32 %s29, 1
        %s196 = scalar_lea.sflag [#allocation3], %s195
        %s197 = sand.u32 %s29, 1
        %s198 = smul.addr %s197, 8
        %s199 = scalar_lea.vmem [#allocation2], %s198
        %p200 = pneg %p42
        %p201 = pneg %p39
        %p202 = pneg %p63
        %p203 = pneg %p60
        %p204 = pneg %p84
        %p205 = pneg %p81
        %p206 = pneg %p110
        %p207 = pneg %p107
        %s208 = sand.u32 %s97, 1
        %s209 = scalar_lea.sflag [#allocation4], %s208
        %s210 = sand.u32 %s97, 1
        %s211 = smul.addr %s210, 8
        %s212 = scalar_lea.vmem [#allocation8], %s211
        %v213 = vld [vmem:[%s182] sm:$0xff]
        %v214 = vld [vmem:[#allocation5] sm:$0xff]
        %v215 = vld [vmem:[#allocation5 + $0x8] sm:$0xff]
        %v216 = vld [vmem:[#allocation7] sm:$0xff]
        %vm217 = vcmask 130048
        %v219 = vsel %vm217, %v213, 0
        %221 = vmatprep.subr.mxu0 0.0
        %222 = vmatpush1.msra.mxu0 %v214
        %223 = vmatprep.subr.mxu0 0.0
        %224 = vmatpush1.msra.mxu0 %v215
        %225 = vmatprep.subr.mxu0 0.0
        %226 = vmatpush1.msra.mxu0 0.0
        %227 = vmatprep.subr.mxu0 0.0
        %228 = vmatpush1.msra.mxu0 0.0
        %229 = vmatprep.subr.mxu0 0.0
        %230 = vmatpush1.msra.mxu0 0.0
        %231 = vmatprep.subr.mxu0 0.0
        %232 = vmatpush1.msra.mxu0 0.0
        %233 = vmatprep.subr.mxu0 0.0
        %234 = vmatpush1.msra.mxu0 0.0
        %235 = vmatprep.subr.mxu0 0.0
        %236 = vmatpush1.msra.mxu0 0.0
        %237 = vmatprep.subr.mxu0 0.0
        %238 = vmatpush1.msra.mxu0 0.0
        %239 = vmatprep.subr.mxu0 0.0
        %240 = vmatpush1.msra.mxu0 0.0
        %241 = vmatprep.subr.mxu0 0.0
        %242 = vmatpush1.msra.mxu0 0.0
        %243 = vmatprep.subr.mxu0 0.0
        %244 = vmatpush1.msra.mxu0 0.0
        %245 = vmatprep.subr.mxu0 0.0
        %246 = vmatpush1.msra.mxu0 0.0
        %247 = vmatprep.subr.mxu0 0.0
        %248 = vmatpush1.msra.mxu0 0.0
        %249 = vmatprep.subr.mxu0 0.0
        %250 = vmatpush1.msra.mxu0 0.0
        %251 = vmatprep.subr.mxu0 0.0
        %252 = vmatpush1.msra.mxu0 0.0
        %253 = vmatprep.subr.mxu0 0.0
        %254 = vmatpush1.msra.mxu0 0.0
        %255 = vmatprep.subr.mxu0 0.0
        %256 = vmatpush1.msra.mxu0 0.0
        %257 = vmatprep.subr.mxu0 0.0
        %258 = vmatpush1.msra.mxu0 0.0
        %259 = vmatprep.subr.mxu0 0.0
        %260 = vmatpush1.msra.mxu0 0.0
        %261 = vmatprep.subr.mxu0 0.0
        %262 = vmatpush1.msra.mxu0 0.0
        %263 = vmatprep.subr.mxu0 0.0
        %264 = vmatpush1.msra.mxu0 0.0
        %265 = vmatprep.subr.mxu0 0.0
        %266 = vmatpush1.msra.mxu0 0.0
        %267 = vmatprep.subr.mxu0 0.0
        %268 = vmatpush1.msra.mxu0 0.0
        %269 = vmatprep.subr.mxu0 0.0
        %270 = vmatpush1.msra.mxu0 0.0
        %271 = vmatprep.subr.mxu0 0.0
        %272 = vmatpush1.msra.mxu0 0.0
        %273 = vmatprep.subr.mxu0 0.0
        %274 = vmatpush1.msra.mxu0 0.0
        %275 = vmatprep.subr.mxu0 0.0
        %276 = vmatpush1.msra.mxu0 0.0
        %277 = vmatprep.subr.mxu0 0.0
        %278 = vmatpush1.msra.mxu0 0.0
        %279 = vmatprep.subr.mxu0 0.0
        %280 = vmatpush1.msra.mxu0 0.0
        %281 = vmatprep.subr.mxu0 0.0
        %282 = vmatpush1.msra.mxu0 0.0
        %283 = vmatprep.subr.mxu0 0.0
        %284 = vmatpush1.msra.mxu0 0.0
        %285 = vmatprep.mubr.f32.mxu0 0.0
        %286 = vmatmul.mubr.f32.gmra.mrb[0].mxu0 %v219
        %v287 = vpop.f32.mrb[0].mxu0
        %v288 = vadd.f32 %v216, %v287
        %v289 = vpop.f32.mrb[0].mxu0
        %290 = vdwg.mxu0
        %v291 = vand.u32 2147483647, %v288
        %vm292 = vcmp.le.f32.partialorder %v291, 0.7853982
        %vm293 = vcmp.lt.s32.totalorder %v288, 0
        %v294 = vand.u32 %v288, 2139095040
        %v295 = vshrl.u32 %v294, 23
        %v296 = vsub.s32 %v295, 127
        %v297 = vand.u32 2147483647, %v288
        %v298 = vand.u32 %v297, 8388607
        %v299 = vor.u32 %v298, 8388608
        %v300 = vsub.s32 0, %v299
        %v301 = vadd.s32 %v296, 1
        %vm302 = vcmp.gt.s32.totalorder %v301, 0
        %v303 = vsel %vm302, %v301, 0
        %v304 = vshrl.u32 %v303, 5
        %v305 = vand.u32 %v303, 31
        %v306 = vsub.s32 32, %v305
        %v307 = vshrl.u32 683565275, %v306
        %v308 = vshll.u32 683565275, %v305
        %v309 = vshrl.u32 2475754826, %v306
        %v310 = vor.u32 %v308, %v309
        %v311 = vshll.u32 2475754826, %v305
        %v312 = vshrl.u32 2131351028, %v306
        %v313 = vor.u32 %v311, %v312
        %v314 = vshll.u32 2131351028, %v305
        %v315 = vshrl.u32 2102212464, %v306
        %v316 = vor.u32 %v314, %v315
        %v317 = vshll.u32 2102212464, %v305
        %v318 = vshrl.u32 920167782, %v306
        %v319 = vor.u32 %v317, %v318
        %v320 = vshll.u32 920167782, %v305
        %v321 = vshrl.u32 1326507024, %v306
        %v322 = vor.u32 %v320, %v321
        %vm323 = vcmp.lt.s32.totalorder %v304, 1
        %vm324 = vcmp.lt.s32.totalorder %v304, 2
        %vm325 = vcmp.lt.s32.totalorder %v304, 3
        %vm326 = vcmp.lt.s32.totalorder %v304, 4
        %v327 = vsel %vm323, %v307, %v310
        %v328 = vsel %vm326, %v316, 2102212464
        %v329 = vsel %vm325, %v313, %v328
        %v330 = vsel %vm324, %v327, %v329
        %v331 = vsel %vm323, %v310, %v313
        %v332 = vsel %vm326, %v319, 920167782
        %v333 = vsel %vm325, %v316, %v332
        %v334 = vsel %vm324, %v331, %v333
        %v335 = vsel %vm323, %v313, %v316
        %v336 = vsel %vm326, %v322, 1326507024
        %v337 = vsel %vm325, %v319, %v336
        %v338 = vsel %vm324, %v335, %v337
        %v339 = vshll.u32 %v299, 8
        %v340 = vmul.u32.u64.compose %v339, %v338
        %v341 = vextract.low.u32 %v340
        %v342 = vextract.high.u32 %v340
        %v343 = vmul.u32.u64.compose %v339, %v334
        %v344 = vextract.low.u32 %v343
        %v345 = vextract.high.u32 %v343
        %v346 = vmul.u32 %v339, %v330
        %v347 = vadd.s32 %v342, %v344
        %vm348 = vc.u32 %v342, %v344
        %v349 = vadd.s32 %v345, 1
        %v350 = vsel %vm348, %v349, %v345
        %v351 = vadd.s32 %v346, %v350
        %v352 = vadd.s32 %v351, 536870912
        %v353 = vshrl.u32 %v352, 30
        %v354 = vshll.u32 %v353, 30
        %v355 = vsub.s32 %v351, %v354
        %vm356 = vcmp.lt.s32.totalorder %v355, 0
        %v357 = vsub.s32 0, %v355
        %v358 = vsel %vm356, %v357, %v355
        %v359 = vclz %v358
        %v360 = vsub.s32 %v359, 2
        %vm361 = vcmp.gt.s32.totalorder 0, %v360
        %v362 = vsel %vm361, 0, %v360
        %v363 = vsub.s32 32, %v362
        %v364 = vshll.u32 %v355, %v362
        %v365 = vshrl.u32 %v347, %v363
        %v366 = vor.u32 %v364, %v365
        %v367 = vsub.s32 4294967266, %v362
        %v368 = vadd.s32 %v367, 127
        %v369 = vshll.u32 %v368, 23
        %v370 = vor.u32 4788187, %v369
        %v371 = vand.u32 2147483647, %v370
        %v373 = vcvt.s32.f32 %v366
        %v374 = vmul.f32 %v373, %v371
        %v375 = vxor.u32 %v374, 2147483648
        %v376 = vsel %vm293, %v375, %v374
        %v377 = vsub.s32 4, %v353
        %v378 = vsel %vm293, %v377, %v353
        %v379 = vsel %vm292, %v288, %v376
        %v380 = vsel %vm292, 0, %v378
        %v381 = vcosq.f32.pop %v379
        %v382 = vsinq.f32.pop %v379
        %vm383 = vweird.f32 %v288
        %v384 = vadd.s32 %v380, 3
        %v385 = vand.u32 %v384, 3
        %vm386 = vcmp.lt.s32.totalorder %v385, 2
        %vm387 = vcmp.eq.s32.totalorder %v385, 0
        %v388 = vxor.u32 %v382, 2147483648
        %v389 = vsel %vm387, %v381, %v388
        %vm390 = vcmp.eq.s32.totalorder %v385, 2
        %v391 = vxor.u32 %v381, 2147483648
        %v392 = vsel %vm390, %v391, %v382
        %v393 = vsel %vm386, %v389, %v392
        %v394 = vsel %vm383, nan, %v393
        %vm395 = vcmask 261120
        %396 = vst.msk [vmem:[%s212] sm:$0xff] %vm395, %v394
        %v397 = vld [vmem:[#allocation7] sm:$0xff]
        %399 = vset.pattern.permute.xlu0 32
        %400 = vperm.xlu0 %399, %v397
        %v401 = vpop.permute.xlu0 %400
        %v403 = vmul.f32 %v401, %v213
        %404 = vset.pattern.permute.xlu0 33
        %405 = vperm.xlu0 %404, %v397
        %v406 = vpop.permute.xlu0 %405
        %v408 = vadd.f32 %v403, %v406
        %410 = vrot.lane.b32.xlu0 %v408, 32
        %v411 = vpop.permute.xlu0 %410
        %vm413 = vcmask 392448
        %414 = vst.msk [vmem:[%s212] sm:$0xff] %vm413, %v411
        %s415 = sand.u32 %s97, 1
        %s416 = scalar_lea.sflag [#allocation4], %s415
        %s417 = sand.u32 %s97, 1
        %s418 = smul.addr %s417, 8
        %s419 = scalar_lea.vmem [#allocation8], %s418
        // Predicated region
        $region45: #{tpu_custom_call.1} parent=31 // pred_check
          %p420 = pneg %p107
        $region46: #{tpu_custom_call.1} parent=31 // pred_check_branch
          %422 = sbr.rel (%p420) target = $region48
        $region47: #{tpu_custom_call.1} parent=31 // pred_region
          %s424 = ssub.s32 128, 128
          %425 = vsyncadd %s416, %s424
          %s426 = smul.addr %s21, 128
          %s427 = scalar_lea.hbm %s3, %s426
          %s429 = sshll.u32 %s419, 4
          %s430 = int_to_ptr.vmem [resolvable:$true] %s429
          %432 = dma.vmem_to_hbm [thread:$0]  %s430, 128, %s427, %s416
        $region48: #{tpu_custom_call.1} parent=31 // pred_fallthru
          _
      $region32: #{tpu_custom_call.1} parent=5 // pred_fallthru
        _
      %p433 = scmp.le.s32.totalorder 2, %s16
      // Predicated region
      $region49: #{tpu_custom_call.1} parent=5 // pred_check
        %p434 = pneg %p433
      $region50: #{tpu_custom_call.1} parent=5 // pred_check_branch
        %436 = sbr.rel (%p434) target = $region52
      $region51: #{tpu_custom_call.1} parent=5 // pred_region
        %s437 = ssub.s32 %s16, 2
        // Predicated region
        $region53: #{tpu_custom_call.1} parent=51 // pred_check
          %p438 = pneg %p113
        $region54: #{tpu_custom_call.1} parent=51 // pred_check_branch
          %440 = sbr.rel (%p438) target = $region56
        $region55: #{tpu_custom_call.1} parent=51 // pred_region
          %s441 = sand.u32 %s98, 1
          %s442 = scalar_lea.sflag [#allocation4], %s441
          %s443 = sand.u32 %s98, 1
          %s444 = smul.addr %s443, 8
          %s445 = scalar_lea.vmem [#allocation8], %s444
          %446 = dma.done %s442, 128
        $region56: #{tpu_custom_call.1} parent=51 // pred_fallthru
          _
      $region52: #{tpu_custom_call.1} parent=5 // pred_fallthru
        _
    $region6: #{tpu_custom_call.1} parent=1 // loop_footer
      %s20 = sadd.s32 1, %s16
    $region7: #{tpu_custom_call.1} parent=1 // loop_footer_branch
      %15 = sbr.rel target = $region3
    $region8: #{tpu_custom_call.1} parent=1 // loop_exit
      _
    %447 = vsyncpa [#allocation3], 1
    %s448 = scalar_lea.sflag [#allocation3], 1
    %449 = vsyncpa %s448, 1
    %450 = vsyncpa [#allocation6], 1
    %451 = vsyncpa [#allocation4], 1
    %s452 = scalar_lea.sflag [#allocation4], 1
    %453 = vsyncpa %s452, 1

</llo_original>
